<compile_context>
chip_gen: v6e
topology: v6e:2x2x1
jax: 0.10.0
libtpu: 0.0.40
codegen_flags: <defaults>
</compile_context>

<pallas_src>
import functools
from typing import NamedTuple

import jax
import jax.numpy as jnp
from jax import lax
from jax.experimental import pallas as pl
from jax.experimental.pallas import tpu as pltpu


LANE = 128                    # row-padding granularity (lane / MXU aligned)
_TK_MAX = 2048                # max K (H*W) tile width
_TM_BLOCKED = 256             # Gram row-block in the fallback path (256x256 MXU)
_FEAT_DTYPE = jnp.bfloat16    # MXU operand dtype (f32 accumulation throughout)


def _round_up(x, m):
    return (x + m - 1) // m * m


def _vmem_budget_bytes():
    """Generation-aware VMEM budget (75% of per-core capacity, v7x-safe fallback)."""
    cap = 0
    try:
        cap = int(getattr(pltpu.get_tpu_info(), "vmem_capacity_bytes", 0) or 0)
    except Exception:
        cap = 0
    if cap <= 0:
        cap = 64 << 20          # conservative default: v7x per-TensorCore VMEM
    return (cap * 3) // 4


class _Plan(NamedTuple):
    mode: str       # "resident" (F read once) or "blocked" (row-tiled fallback)
    m: int
    k: int
    m_pad: int
    k_pad: int
    tk: int
    tm: int         # Gram row-block (== m_pad for the resident path)
    vmem_limit: int


def _k_tile_options(k_pad):
    """128-multiple divisors of k_pad that are <= _TK_MAX, largest first."""
    q = k_pad // LANE
    return sorted({d * LANE for d in range(1, q + 1)
                   if q % d == 0 and d * LANE <= _TK_MAX}, reverse=True)


def _make_plan(n, c, h, w, force_blocked=False):
    m, k = n * c, h * w
    budget = _vmem_budget_bytes()
    fsz = jnp.dtype(_FEAT_DTYPE).itemsize
    k_pad = _round_up(k, LANE)
    tk_options = _k_tile_options(k_pad)

    if not force_blocked:
        # Resident path: full (M_pad, M_pad) f32 Gram accumulator, one
        # double-buffered (M_pad, tk) bf16 feature slab, double-buffered target.
        m_pad = _round_up(m, LANE)
        for tk in tk_options:
            need = 2 * m_pad * tk * fsz + 3 * m_pad * m_pad * 4
            if need <= budget:
                limit = int(min(budget, max(need + (8 << 20), 16 << 20)))
                return _Plan("resident", m, k, m_pad, k_pad, tk, m_pad, limit)

    # Blocked fallback: Gram rows tiled by _TM_BLOCKED; the full (M_pad, tk)
    # slab is the shared RHS stream (re-read once per row block).
    tm = _TM_BLOCKED
    m_pad = _round_up(m, tm)
    for tk in tk_options:
        need = (2 * tm * tk * fsz + 2 * m_pad * tk * fsz
                + tm * m_pad * 4 + 2 * tm * m_pad * 4)
        if need <= budget:
            limit = int(min(budget, max(need + (8 << 20), 16 << 20)))
            return _Plan("blocked", m, k, m_pad, k_pad, tk, tm, limit)

    raise ValueError("feature matrix too large for VMEM-tiled StyleLoss kernel")


def _features_padded(x, plan):
    """NCHW -> zero-padded bf16 (M_pad, K_pad) feature matrix."""
    feats = x.reshape(plan.m, plan.k).astype(_FEAT_DTYPE)
    return jnp.pad(feats, ((0, plan.m_pad - plan.m), (0, plan.k_pad - plan.k)))


# ----------------------------------------------------------------------------
# Kernels
# ----------------------------------------------------------------------------
def _gram_resident_kernel(f_ref, g_ref, acc_ref):
    """Raw Gram, F resident: acc += F_k F_k^T over K tiles; write once at the end."""
    kk = pl.program_id(0)

    @pl.when(kk == 0)
    def _():
        acc_ref[...] = jnp.zeros_like(acc_ref)

    f = f_ref[...]
    # NT contraction of the slab with itself (no explicit transpose copy).
    acc_ref[...] += lax.dot_general(
        f, f, dimension_numbers=(((1,), (1,)), ((), ())),
        preferred_element_type=jnp.float32)

    @pl.when(kk == pl.num_programs(0) - 1)
    def _():
        g_ref[...] = acc_ref[...]


def _style_resident_kernel(f_ref, t_ref, loss_ref, acc_ref, *, scale):
    """Resident Gram accumulation + one-shot MSE epilogue vs the raw target."""
    kk = pl.program_id(0)

    @pl.when(kk == 0)
    def _():
        acc_ref[...] = jnp.zeros_like(acc_ref)

    f = f_ref[...]
    acc_ref[...] += lax.dot_general(
        f, f, dimension_numbers=(((1,), (1,)), ((), ())),
        preferred_element_type=jnp.float32)

    @pl.when(kk == pl.num_programs(0) - 1)
    def _():
        diff = acc_ref[...] - t_ref[...]
        # 1/(N*C*H*W)^2 and 1/(M*M) folded into a single scalar multiply.
        loss_ref[...] = jnp.sum(diff * diff, keepdims=True) * scale


def _gram_blocked_kernel(fr_ref, fall_ref, g_ref, acc_ref):
    """Row-blocked raw Gram (fallback): acc += Fr F^T over K tiles."""
    kk = pl.program_id(1)

    @pl.when(kk == 0)
    def _():
        acc_ref[...] = jnp.zeros_like(acc_ref)

    acc_ref[...] += lax.dot_general(
        fr_ref[...], fall_ref[...],
        dimension_numbers=(((1,), (1,)), ((), ())),
        preferred_element_type=jnp.float32)

    @pl.when(kk == pl.num_programs(1) - 1)
    def _():
        g_ref[...] = acc_ref[...]


def _style_blocked_kernel(fr_ref, fall_ref, t_ref, loss_ref, acc_ref, psum_ref,
                          *, scale):
    """Row-blocked Gram + running MSE partial sum (fallback for huge M)."""
    i = pl.program_id(0)
    kk = pl.program_id(1)
    ni = pl.num_programs(0)
    nk = pl.num_programs(1)

    @pl.when(jnp.logical_and(i == 0, kk == 0))
    def _():
        psum_ref[...] = jnp.zeros_like(psum_ref)

    @pl.when(kk == 0)
    def _():
        acc_ref[...] = jnp.zeros_like(acc_ref)

    acc_ref[...] += lax.dot_general(
        fr_ref[...], fall_ref[...],
        dimension_numbers=(((1,), (1,)), ((), ())),
        preferred_element_type=jnp.float32)

    @pl.when(kk == nk - 1)
    def _():
        diff = acc_ref[...] - t_ref[...]
        psum_ref[...] += jnp.sum(diff * diff, keepdims=True)

    @pl.when(jnp.logical_and(i == ni - 1, kk == nk - 1))
    def _():
        loss_ref[...] = psum_ref[...] * scale


# ----------------------------------------------------------------------------
# Wrappers
# ----------------------------------------------------------------------------
def _gram_raw_padded(feats, plan):
    """Raw (unscaled) Gram of the padded features, (M_pad, M_pad) float32."""
    m_pad, k_pad, tk, tm = plan.m_pad, plan.k_pad, plan.tk, plan.tm
    nk = k_pad // tk
    fsz = feats.dtype.itemsize

    if plan.mode == "resident":
        cost = pl.CostEstimate(
            flops=2 * m_pad * m_pad * k_pad, transcendentals=0,
            bytes_accessed=m_pad * k_pad * fsz + m_pad * m_pad * 4)
        return pl.pallas_call(
            _gram_resident_kernel,
            out_shape=jax.ShapeDtypeStruct((m_pad, m_pad), jnp.float32),
            grid_spec=pltpu.PrefetchScalarGridSpec(
                num_scalar_prefetch=0,
                grid=(nk,),
                in_specs=[pl.BlockSpec((m_pad, tk), lambda kk: (0, kk))],
                out_specs=pl.BlockSpec((m_pad, m_pad), lambda kk: (0, 0)),
                scratch_shapes=[pltpu.VMEM((m_pad, m_pad), jnp.float32)],
            ),
            compiler_params=pltpu.CompilerParams(
                dimension_semantics=("arbitrary",),
                vmem_limit_bytes=plan.vmem_limit),
            cost_estimate=cost,
        )(feats)

    n_rb = m_pad // tm
    cost = pl.CostEstimate(
        flops=2 * m_pad * m_pad * k_pad, transcendentals=0,
        bytes_accessed=n_rb * (tm + m_pad) * k_pad * fsz + m_pad * m_pad * 4)
    return pl.pallas_call(
        _gram_blocked_kernel,
        out_shape=jax.ShapeDtypeStruct((m_pad, m_pad), jnp.float32),
        grid_spec=pltpu.PrefetchScalarGridSpec(
            num_scalar_prefetch=0,
            grid=(n_rb, nk),
            in_specs=[
                pl.BlockSpec((tm, tk), lambda i, kk: (i, kk)),
                pl.BlockSpec((m_pad, tk), lambda i, kk: (0, kk)),
            ],
            out_specs=pl.BlockSpec((tm, m_pad), lambda i, kk: (i, 0)),
            scratch_shapes=[pltpu.VMEM((tm, m_pad), jnp.float32)],
        ),
        compiler_params=pltpu.CompilerParams(
            dimension_semantics=("parallel", "arbitrary"),
            vmem_limit_bytes=plan.vmem_limit),
        cost_estimate=cost,
    )(feats, feats)


def _style_loss_padded(feats, t_raw_pad, plan):
    """MSE between scaled Grams from padded bf16 features and the raw f32 target."""
    m, k = plan.m, plan.k
    m_pad, k_pad, tk, tm = plan.m_pad, plan.k_pad, plan.tk, plan.tm
    nk = k_pad // tk
    fsz = feats.dtype.itemsize
    inv = 1.0 / float(m * k)
    scale = inv * inv / float(m * m)

    if plan.mode == "resident":
        cost = pl.CostEstimate(
            flops=2 * m_pad * m_pad * k_pad + 3 * m_pad * m_pad,
            transcendentals=0,
            bytes_accessed=m_pad * k_pad * fsz + m_pad * m_pad * 4 + 4)
        loss = pl.pallas_call(
            functools.partial(_style_resident_kernel, scale=scale),
            out_shape=jax.ShapeDtypeStruct((1, 1), jnp.float32),
            grid_spec=pltpu.PrefetchScalarGridSpec(
                num_scalar_prefetch=0,
                grid=(nk,),
                in_specs=[
                    pl.BlockSpec((m_pad, tk), lambda kk: (0, kk)),
                    pl.BlockSpec((m_pad, m_pad), lambda kk: (0, 0)),
                ],
                out_specs=pl.BlockSpec((1, 1), lambda kk: (0, 0)),
                scratch_shapes=[pltpu.VMEM((m_pad, m_pad), jnp.float32)],
            ),
            compiler_params=pltpu.CompilerParams(
                dimension_semantics=("arbitrary",),
                vmem_limit_bytes=plan.vmem_limit),
            cost_estimate=cost,
        )(feats, t_raw_pad)
        return loss[0, 0]

    # TODO(synk): per-row-block lane-dense partial sums + "parallel" on the row
    # axis would enable v7x megacore here; kept serial to avoid a psum race.
    n_rb = m_pad // tm
    cost = pl.CostEstimate(
        flops=2 * m_pad * m_pad * k_pad + 3 * m_pad * m_pad,
        transcendentals=0,
        bytes_accessed=n_rb * (tm + m_pad) * k_pad * fsz + m_pad * m_pad * 4 + 4)
    loss = pl.pallas_call(
        functools.partial(_style_blocked_kernel, scale=scale),
        out_shape=jax.ShapeDtypeStruct((1, 1), jnp.float32),
        grid_spec=pltpu.PrefetchScalarGridSpec(
            num_scalar_prefetch=0,
            grid=(n_rb, nk),
            in_specs=[
                pl.BlockSpec((tm, tk), lambda i, kk: (i, kk)),
                pl.BlockSpec((m_pad, tk), lambda i, kk: (0, kk)),
                pl.BlockSpec((tm, m_pad), lambda i, kk: (i, 0)),
            ],
            out_specs=pl.BlockSpec((1, 1), lambda i, kk: (0, 0)),
            scratch_shapes=[
                pltpu.VMEM((tm, m_pad), jnp.float32),   # Gram row-block accumulator
                pltpu.VMEM((1, 1), jnp.float32),        # running squared-error sum
            ],
        ),
        compiler_params=pltpu.CompilerParams(
            dimension_semantics=("arbitrary", "arbitrary"),
            vmem_limit_bytes=plan.vmem_limit),
        cost_estimate=cost,
    )(feats, feats, t_raw_pad)
    return loss[0, 0]


# ----------------------------------------------------------------------------
# Public API
# ----------------------------------------------------------------------------
def gram_matrix(x, *, _force_blocked=False):
    """x: (N, C, H, W) -> Gram matrix (N*C, N*C) float32, divided by N*C*H*W."""
    n, c, h, w = x.shape
    plan = _make_plan(n, c, h, w, force_blocked=_force_blocked)
    feats = _features_padded(x, plan)
    g_raw = _gram_raw_padded(feats, plan)
    return g_raw[:plan.m, :plan.m] * (1.0 / float(plan.m * plan.k))


def style_loss(x, target_gram, *, _force_blocked=False):
    """x: (N, C, H, W); target_gram: (N*C, N*C) scaled Gram. Returns scalar MSE."""
    n, c, h, w = x.shape
    plan = _make_plan(n, c, h, w, force_blocked=_force_blocked)
    feats = _features_padded(x, plan)
    t_raw = target_gram.astype(jnp.float32) * float(plan.m * plan.k)
    t_raw_pad = jnp.pad(t_raw, ((0, plan.m_pad - plan.m),
                                (0, plan.m_pad - plan.m)))
    return _style_loss_padded(feats, t_raw_pad, plan)


class StyleLoss:
    """JAX/Pallas port of the PyTorch StyleLoss module (forward is a pass-through)."""

    def __init__(self, target_feature, *, _force_blocked=False):
        n, c, h, w = target_feature.shape
        self._plan = _make_plan(n, c, h, w, force_blocked=_force_blocked)
        feats = _features_padded(target_feature, self._plan)
        # Raw (unscaled) padded target Gram, precomputed once: the 1/(N*C*H*W)
        # scaling is folded into the final scalar multiply inside the loss kernel.
        self._t_raw_pad = _gram_raw_padded(feats, self._plan)
        m, k = self._plan.m, self._plan.k
        # Public attribute matching the PyTorch module (a detached constant).
        self.target = self._t_raw_pad[:m, :m] * (1.0 / float(m * k))
        # TODO(synk): self.loss is Python-side state (as in the PyTorch module);
        # it will not compose under jax.jit of a surrounding model.
        self.loss = None

    def __call__(self, x):
        n, c, h, w = x.shape
        assert (n * c, h * w) == (self._plan.m, self._plan.k), \
            "input must match target_feature geometry"
        feats = _features_padded(x, self._plan)
        self.loss = _style_loss_padded(feats, self._t_raw_pad, self._plan)
        return x  # pass-through, identical to the PyTorch module


# ----------------------------------------------------------------------------
# Main
# ----------------------------------------------------------------------------
if __name__ == "__main__":
    key = jax.random.PRNGKey(0)
    k1, k2, k3, k4 = jax.random.split(key, 4)

    def ref_gram(t):
        a, b, c, d = t.shape
        f = t.reshape(a * b, c * d).astype(jnp.float32)
        return (f @ f.T) / (a * b * c * d)

    def ref_loss(xx, tt):
        return jnp.mean((ref_gram(xx) - ref_gram(tt)) ** 2)

    # --- test 1: canonical small shape, resident (F-read-once) path ---------
    N, C, H, W = 2, 4, 16, 16
    target_feature = jax.random.normal(k1, (N, C, H, W), dtype=jnp.float32)
    x = jax.random.normal(k2, (N, C, H, W), dtype=jnp.float32)

    module = StyleLoss(target_feature)
    out = module(x)
    loss = jax.block_until_ready(module.loss)
    out = jax.block_until_ready(out)

    assert out.shape == x.shape and jnp.allclose(out, x)
    # bf16 MXU operands (f32 accumulation) -> loosened tolerances.
    g_x = jax.block_until_ready(gram_matrix(x))
    assert jnp.allclose(g_x, ref_gram(x), rtol=5e-2, atol=5e-4)
    assert jnp.allclose(module.target, ref_gram(target_feature),
                        rtol=5e-2, atol=5e-4)
    rl = ref_loss(x, target_feature)
    assert jnp.allclose(loss, rl, rtol=5e-2, atol=1e-8), (loss, rl)

    # --- test 2: larger M / K: multi-K-step resident path + row-blocked
    #             fallback (forced) -----------------------------------------
    N2, C2, H2, W2 = 2, 160, 48, 48
    tfeat2 = jax.random.normal(k3, (N2, C2, H2, W2), dtype=jnp.float32)
    x2 = jax.random.normal(k4, (N2, C2, H2, W2), dtype=jnp.float32)
    t_gram2 = ref_gram(tfeat2)
    rl2 = ref_loss(x2, tfeat2)

    loss2_res = jax.block_until_ready(style_loss(x2, t_gram2))
    assert jnp.allclose(loss2_res, rl2, rtol=5e-2, atol=1e-10), (loss2_res, rl2)

    loss2_blk = jax.block_until_ready(
        style_loss(x2, t_gram2, _force_blocked=True))
    assert jnp.allclose(loss2_blk, rl2, rtol=5e-2, atol=1e-10), (loss2_blk, rl2)

    g2_blk = jax.block_until_ready(gram_matrix(x2, _force_blocked=True))
    assert jnp.allclose(g2_blk, ref_gram(x2), rtol=5e-2, atol=5e-4)

    print("KERNEL_OK")
</pallas_src>

<mosaic_0001>
module attributes {stable_mosaic.version = 11 : i64} {
  func.func @_gram_resident_kernel(%arg0: i32, %arg1: memref<128x256xbf16, #tpu.memory_space<vmem>>, %arg2: memref<128x128xf32, #tpu.memory_space<vmem>>, %arg3: memref<128x128xf32, #tpu.memory_space<vmem>>) attributes {dimension_semantics = [#tpu.dimension_semantics<arbitrary>], iteration_bounds = array<i64: 1>, scalar_prefetch = 0 : i64, scratch_operands = 1 : i64, tpu.core_type = #tpu.core_type<tc>, window_params = [{transform_indices = @transform_0, window_bounds = array<i64: 128, 256>}, {pipeline_mode = #tpu.pipeline_mode<synchronous>, transform_indices = @transform_1, window_bounds = array<i64: 128, 128>}]} {
    %c0_i32 = arith.constant 0 : i32
    %0 = arith.cmpi eq, %arg0, %c0_i32 : i32
    %1 = arith.extui %0 : i1 to i32
    %c0_i32_0 = arith.constant 0 : i32
    %2 = arith.cmpi ne, %1, %c0_i32_0 : i32
    scf.if %2 {
      %cst_8 = arith.constant 0.000000e+00 : f32
      %11 = vector.broadcast %cst_8 : f32 to vector<128x128xf32>
      %c0_9 = arith.constant 0 : index
      %c0_10 = arith.constant 0 : index
      %12 = vector.load %arg3[%c0_9, %c0_10] : memref<128x128xf32, #tpu.memory_space<vmem>>, vector<128x128xf32>
      tpu.vector_store %arg3[%c0_9, %c0_10], %11 {strides = array<i32>} : memref<128x128xf32, #tpu.memory_space<vmem>>, vector<128x128xf32>,
    } else {
    }
    %c0 = arith.constant 0 : index
    %c0_1 = arith.constant 0 : index
    %3 = vector.load %arg1[%c0, %c0_1] : memref<128x256xbf16, #tpu.memory_space<vmem>>, vector<128x256xbf16>
    %c0_2 = arith.constant 0 : index
    %c0_3 = arith.constant 0 : index
    %4 = vector.load %arg3[%c0_2, %c0_3] : memref<128x128xf32, #tpu.memory_space<vmem>>, vector<128x128xf32>
    %cst = arith.constant dense<0.000000e+00> : vector<128x128xf32>
    %5 = tpu.matmul %3, %3, %cst {dimension_numbers = #tpu.dot_dimension_numbers<[1], [1], [0], [0], [0, 0, 1, 0], [], []>} : vector<128x256xbf16>, vector<128x256xbf16>, vector<128x128xf32> -> vector<128x128xf32>
    %6 = arith.addf %4, %5 : vector<128x128xf32>
    %c0_4 = arith.constant 0 : index
    %c0_5 = arith.constant 0 : index
    %7 = vector.load %arg3[%c0_4, %c0_5] : memref<128x128xf32, #tpu.memory_space<vmem>>, vector<128x128xf32>
    tpu.vector_store %arg3[%c0_4, %c0_5], %6 {strides = array<i32>} : memref<128x128xf32, #tpu.memory_space<vmem>>, vector<128x128xf32>,
    %c0_i32_6 = arith.constant 0 : i32
    %8 = arith.cmpi eq, %arg0, %c0_i32_6 : i32
    %9 = arith.extui %8 : i1 to i32
    %c0_i32_7 = arith.constant 0 : i32
    %10 = arith.cmpi ne, %9, %c0_i32_7 : i32
    scf.if %10 {
      %c0_8 = arith.constant 0 : index
      %c0_9 = arith.constant 0 : index
      %11 = vector.load %arg3[%c0_8, %c0_9] : memref<128x128xf32, #tpu.memory_space<vmem>>, vector<128x128xf32>
      %c0_10 = arith.constant 0 : index
      %c0_11 = arith.constant 0 : index
      %12 = vector.load %arg2[%c0_10, %c0_11] : memref<128x128xf32, #tpu.memory_space<vmem>>, vector<128x128xf32>
      tpu.vector_store %arg2[%c0_10, %c0_11], %11 {strides = array<i32>} : memref<128x128xf32, #tpu.memory_space<vmem>>, vector<128x128xf32>,
    } else {
    }
    return
  }
  func.func @transform_0(%arg0: i32) -> (i32, i32) {
    %c0_i32 = arith.constant 0 : i32
    %c0_i32_0 = arith.constant 0 : i32
    return %c0_i32, %arg0 : i32, i32
  }
  func.func @transform_1(%arg0: i32) -> (i32, i32) {
    %c0_i32 = arith.constant 0 : i32
    %c0_i32_0 = arith.constant 0 : i32
    %c0_i32_1 = arith.constant 0 : i32
    return %c0_i32, %c0_i32_0 : i32, i32
  }
}

</mosaic_0001>

<llo_original>
// kernel: tpu_custom_call.1
$region0: #{tpu_custom_call.1}
  #allocation0 [shape = 'u32[]', space=smem, size = 0x4, offset = 0x4, fixed_abs, tag = 'smem constant byte address 0x4 - core index']
  #allocation1 [shape = 'u32[144,128]{1,0:T(1,128)}', space=vmem, size = 0x12000, scoped, tag = 'internal scratch']
  #allocation2 [shape = 'f32[128,128]{1,0:T(8,128)}', space=vmem, size = 0x10000, scoped, tag = 'scratch operand']
  %s0 = inlined_call_operand.hbm [shape: bf16[128,256], index: 0, kind: input, shape index: {}]
  %s1 = inlined_call_operand.hbm [shape: f32[128,128], index: 1, kind: output, shape index: {}]
  %s2 = sld [smem:[#allocation0]]
  $region26: #{tpu_custom_call.1} parent=0
    _
  %s4 = ssub.s32 1, %s2
  %s5 = scalar_select 0, %s4, %s2
  $region1: #{tpu_custom_call.1} parent=0
    #allocation3 [shape = 'u8[65536]{0}', space=vmem, size = 0x10000, scoped, tag = 'input window, operand 0, single buffered']
    #allocation4 [shape = 's32[1]{0}', space=sflag, size = 0x4, scoped, tag = 'scoped memory for tpu_custom_call.1']
    #allocation5 [shape = 's32[1]{0}', space=sflag, size = 0x4, scoped, tag = 'scoped memory for tpu_custom_call.1']
    #allocation6 [shape = 'u8[65536]{0}', space=vmem, size = 0x10000, scoped, tag = 'output window, operand 0, single buffered']
    %6 = vsyncpa [#allocation4], 0
    %7 = vsyncpa [#allocation5], 0
    // Predicated region
    $region2: #{tpu_custom_call.1} parent=1 // pred_check
      _
    $region3: #{tpu_custom_call.1} parent=1 // pred_check_branch
      %9 = sbr.rel (0) target = $region5
    $region4: #{tpu_custom_call.1} parent=1 // pred_region
      %s11 = ssub.s32 2048, 2048
      %12 = vsyncadd [#allocation4], %s11
      %s13 = sshll.u32 [#allocation3], 4
      %s14 = int_to_ptr.vmem [resolvable:$true] %s13
      %19 = dma.hbm_to_vmem [thread:$0]  %s0, 2048, %s14, [#allocation4], 128, 128, 8
    $region5: #{tpu_custom_call.1} parent=1 // pred_fallthru
      _
    // Predicated region
    $region6: #{tpu_custom_call.1} parent=1 // pred_check
      _
    $region7: #{tpu_custom_call.1} parent=1 // pred_check_branch
      %21 = sbr.rel (0) target = $region9
    $region8: #{tpu_custom_call.1} parent=1 // pred_region
      %22 = dma.done [#allocation4], 2048
    $region9: #{tpu_custom_call.1} parent=1 // pred_fallthru
      _
    %p24 = scmp.eq.s32.totalorder 0, 0
    // Predicated region
    $region10: #{tpu_custom_call.1} parent=1 // pred_check
      %p25 = pneg %p24
    $region11: #{tpu_custom_call.1} parent=1 // pred_check_branch
      %27 = sbr.rel (%p25) target = $region13
    $region12: #{tpu_custom_call.1} parent=1 // pred_region
      %28 = vst [vmem:[#allocation2] sm:$0xff] 0.0
      %29 = vst [vmem:[#allocation2 + $0x8] sm:$0xff] 0.0
      %30 = vst [vmem:[#allocation2 + $0x10] sm:$0xff] 0.0
      %31 = vst [vmem:[#allocation2 + $0x18] sm:$0xff] 0.0
      %32 = vst [vmem:[#allocation2 + $0x20] sm:$0xff] 0.0
      %33 = vst [vmem:[#allocation2 + $0x28] sm:$0xff] 0.0
      %34 = vst [vmem:[#allocation2 + $0x30] sm:$0xff] 0.0
      %35 = vst [vmem:[#allocation2 + $0x38] sm:$0xff] 0.0
      %36 = vst [vmem:[#allocation2 + $0x40] sm:$0xff] 0.0
      %37 = vst [vmem:[#allocation2 + $0x48] sm:$0xff] 0.0
      %38 = vst [vmem:[#allocation2 + $0x50] sm:$0xff] 0.0
      %39 = vst [vmem:[#allocation2 + $0x58] sm:$0xff] 0.0
      %40 = vst [vmem:[#allocation2 + $0x60] sm:$0xff] 0.0
      %41 = vst [vmem:[#allocation2 + $0x68] sm:$0xff] 0.0
      %42 = vst [vmem:[#allocation2 + $0x70] sm:$0xff] 0.0
      %43 = vst [vmem:[#allocation2 + $0x78] sm:$0xff] 0.0
    $region13: #{tpu_custom_call.1} parent=1 // pred_fallthru
      _
    %v44 = vld [vmem:[#allocation3] sm:$0xff]
    %v45 = vld [vmem:[#allocation3 + $0x8] sm:$0xff]
    %v46 = vld [vmem:[#allocation3 + $0x10] sm:$0xff]
    %v47 = vld [vmem:[#allocation3 + $0x18] sm:$0xff]
    %v48 = vld [vmem:[#allocation3 + $0x20] sm:$0xff]
    %v49 = vld [vmem:[#allocation3 + $0x28] sm:$0xff]
    %v50 = vld [vmem:[#allocation3 + $0x30] sm:$0xff]
    %v51 = vld [vmem:[#allocation3 + $0x38] sm:$0xff]
    %v52 = vld [vmem:[#allocation3 + $0x40] sm:$0xff]
    %v53 = vld [vmem:[#allocation3 + $0x48] sm:$0xff]
    %v54 = vld [vmem:[#allocation3 + $0x50] sm:$0xff]
    %v55 = vld [vmem:[#allocation3 + $0x58] sm:$0xff]
    %v56 = vld [vmem:[#allocation3 + $0x60] sm:$0xff]
    %v57 = vld [vmem:[#allocation3 + $0x68] sm:$0xff]
    %v58 = vld [vmem:[#allocation3 + $0x70] sm:$0xff]
    %v59 = vld [vmem:[#allocation3 + $0x78] sm:$0xff]
    %v60 = vld [vmem:[#allocation2] sm:$0xff]
    %v61 = vld [vmem:[#allocation2 + $0x8] sm:$0xff]
    %v62 = vld [vmem:[#allocation2 + $0x10] sm:$0xff]
    %v63 = vld [vmem:[#allocation2 + $0x18] sm:$0xff]
    %v64 = vld [vmem:[#allocation2 + $0x20] sm:$0xff]
    %v65 = vld [vmem:[#allocation2 + $0x28] sm:$0xff]
    %v66 = vld [vmem:[#allocation2 + $0x30] sm:$0xff]
    %v67 = vld [vmem:[#allocation2 + $0x38] sm:$0xff]
    %v68 = vld [vmem:[#allocation2 + $0x40] sm:$0xff]
    %v69 = vld [vmem:[#allocation2 + $0x48] sm:$0xff]
    %v70 = vld [vmem:[#allocation2 + $0x50] sm:$0xff]
    %v71 = vld [vmem:[#allocation2 + $0x58] sm:$0xff]
    %v72 = vld [vmem:[#allocation2 + $0x60] sm:$0xff]
    %v73 = vld [vmem:[#allocation2 + $0x68] sm:$0xff]
    %v74 = vld [vmem:[#allocation2 + $0x70] sm:$0xff]
    %v75 = vld [vmem:[#allocation2 + $0x78] sm:$0xff]
    %v92 = vunpack.c.l.b16 %v44
    %v93 = vunpack.c.h.b16 %v44
    %v94 = vunpack.c.l.b16 %v45
    %v95 = vunpack.c.h.b16 %v45
    %v96 = vunpack.c.l.b16 %v46
    %v97 = vunpack.c.h.b16 %v46
    %v98 = vunpack.c.l.b16 %v47
    %v99 = vunpack.c.h.b16 %v47
    %v100 = vunpack.c.l.b16 %v48
    %v101 = vunpack.c.h.b16 %v48
    %v102 = vunpack.c.l.b16 %v49
    %v103 = vunpack.c.h.b16 %v49
    %v104 = vunpack.c.l.b16 %v50
    %v105 = vunpack.c.h.b16 %v50
    %v106 = vunpack.c.l.b16 %v51
    %v107 = vunpack.c.h.b16 %v51
    %v108 = vunpack.c.l.b16 %v52
    %v109 = vunpack.c.h.b16 %v52
    %v110 = vunpack.c.l.b16 %v53
    %v111 = vunpack.c.h.b16 %v53
    %v112 = vunpack.c.l.b16 %v54
    %v113 = vunpack.c.h.b16 %v54
    %v114 = vunpack.c.l.b16 %v55
    %v115 = vunpack.c.h.b16 %v55
    %v116 = vunpack.c.l.b16 %v56
    %v117 = vunpack.c.h.b16 %v56
    %v118 = vunpack.c.l.b16 %v57
    %v119 = vunpack.c.h.b16 %v57
    %v120 = vunpack.c.l.b16 %v58
    %v121 = vunpack.c.h.b16 %v58
    %v122 = vunpack.c.l.b16 %v59
    %v123 = vunpack.c.h.b16 %v59
    %v124 = vpack.c.b16 %v94, %v92
    %v125 = vpack.c.b16 %v95, %v93
    %v126 = vpack.c.b16 %v98, %v96
    %v127 = vpack.c.b16 %v99, %v97
    %v128 = vpack.c.b16 %v102, %v100
    %v129 = vpack.c.b16 %v103, %v101
    %v130 = vpack.c.b16 %v106, %v104
    %v131 = vpack.c.b16 %v107, %v105
    %v132 = vpack.c.b16 %v110, %v108
    %v133 = vpack.c.b16 %v111, %v109
    %v134 = vpack.c.b16 %v114, %v112
    %v135 = vpack.c.b16 %v115, %v113
    %v136 = vpack.c.b16 %v118, %v116
    %v137 = vpack.c.b16 %v119, %v117
    %v138 = vpack.c.b16 %v122, %v120
    %v139 = vpack.c.b16 %v123, %v121
    %156 = vmatprep.subr.bf16.mxu0 %v139
    %157 = vmatpush1.bf16.xpose.msra.mxu0 %v138
    %158 = vmatprep.subr.bf16.mxu0 %v137
    %159 = vmatpush1.bf16.xpose.msra.mxu0 %v136
    %160 = vmatprep.subr.bf16.mxu0 %v135
    %161 = vmatpush1.bf16.xpose.msra.mxu0 %v134
    %162 = vmatprep.subr.bf16.mxu0 %v133
    %163 = vmatpush1.bf16.xpose.msra.mxu0 %v132
    %164 = vmatprep.subr.bf16.mxu0 %v131
    %165 = vmatpush1.bf16.xpose.msra.mxu0 %v130
    %166 = vmatprep.subr.bf16.mxu0 %v129
    %167 = vmatpush1.bf16.xpose.msra.mxu0 %v128
    %168 = vmatprep.subr.bf16.mxu0 %v127
    %169 = vmatpush1.bf16.xpose.msra.mxu0 %v126
    %170 = vmatprep.subr.bf16.mxu0 %v125
    %171 = vmatpush1.bf16.xpose.msra.mxu0 %v124
    %172 = vmatprep.subr.bf16.mxu0 0
    %173 = vmatpush2.bf16.xpose.msra.mxu0 0
    %174 = vmatprep.subr.bf16.mxu0 0
    %175 = vmatpush2.bf16.xpose.msra.mxu0 0
    %176 = vmatprep.subr.bf16.mxu0 0
    %177 = vmatpush2.bf16.xpose.msra.mxu0 0
    %178 = vmatprep.subr.bf16.mxu0 0
    %179 = vmatpush2.bf16.xpose.msra.mxu0 0
    %180 = vmatprep.subr.bf16.mxu0 0
    %181 = vmatpush2.bf16.xpose.msra.mxu0 0
    %182 = vmatprep.subr.bf16.mxu0 0
    %183 = vmatpush2.bf16.xpose.msra.mxu0 0
    %184 = vmatprep.subr.bf16.mxu0 0
    %185 = vmatpush2.bf16.xpose.msra.mxu0 0
    %186 = vmatprep.subr.bf16.mxu0 0
    %187 = vmatpush2.bf16.xpose.msra.mxu0 0
    %188 = vmatprep.mubr.bf16.mxu0 %v125
    %189 = vmatmul.mubr.bf16.gmra.mxu0 %v124
    %v190 = vpop.f32.mrf.mxu0
    %v191 = vadd.f32 0.0, %v190
    %v192 = vpop.f32.mrf.mxu0
    %v193 = vpop.f32.mrf.mxu0
    %v194 = vadd.f32 0.0, %v193
    %v195 = vpop.f32.mrf.mxu0
    %196 = vmatprep.mubr.bf16.mxu0 %v127
    %197 = vmatmul.mubr.bf16.gmra.mxu0 %v126
    %v198 = vpop.f32.mrf.mxu0
    %v199 = vadd.f32 0.0, %v198
    %v200 = vpop.f32.mrf.mxu0
    %v201 = vpop.f32.mrf.mxu0
    %v202 = vadd.f32 0.0, %v201
    %v203 = vpop.f32.mrf.mxu0
    %204 = vmatprep.mubr.bf16.mxu0 %v129
    %205 = vmatmul.mubr.bf16.gmra.mxu0 %v128
    %v206 = vpop.f32.mrf.mxu0
    %v207 = vadd.f32 0.0, %v206
    %v208 = vpop.f32.mrf.mxu0
    %v209 = vpop.f32.mrf.mxu0
    %v210 = vadd.f32 0.0, %v209
    %v211 = vpop.f32.mrf.mxu0
    %212 = vmatprep.mubr.bf16.mxu0 %v131
    %213 = vmatmul.mubr.bf16.gmra.mxu0 %v130
    %v214 = vpop.f32.mrf.mxu0
    %v215 = vadd.f32 0.0, %v214
    %v216 = vpop.f32.mrf.mxu0
    %v217 = vpop.f32.mrf.mxu0
    %v218 = vadd.f32 0.0, %v217
    %v219 = vpop.f32.mrf.mxu0
    %220 = vmatprep.mubr.bf16.mxu0 %v133
    %221 = vmatmul.mubr.bf16.gmra.mxu0 %v132
    %v222 = vpop.f32.mrf.mxu0
    %v223 = vadd.f32 0.0, %v222
    %v224 = vpop.f32.mrf.mxu0
    %v225 = vpop.f32.mrf.mxu0
    %v226 = vadd.f32 0.0, %v225
    %v227 = vpop.f32.mrf.mxu0
    %228 = vmatprep.mubr.bf16.mxu0 %v135
    %229 = vmatmul.mubr.bf16.gmra.mxu0 %v134
    %v230 = vpop.f32.mrf.mxu0
    %v231 = vadd.f32 0.0, %v230
    %v232 = vpop.f32.mrf.mxu0
    %v233 = vpop.f32.mrf.mxu0
    %v234 = vadd.f32 0.0, %v233
    %v235 = vpop.f32.mrf.mxu0
    %236 = vmatprep.mubr.bf16.mxu0 %v137
    %237 = vmatmul.mubr.bf16.gmra.mxu0 %v136
    %v238 = vpop.f32.mrf.mxu0
    %v239 = vadd.f32 0.0, %v238
    %v240 = vpop.f32.mrf.mxu0
    %v241 = vpop.f32.mrf.mxu0
    %v242 = vadd.f32 0.0, %v241
    %v243 = vpop.f32.mrf.mxu0
    %244 = vmatprep.mubr.bf16.mxu0 %v139
    %245 = vmatmul.mubr.bf16.gmra.mxu0 %v138
    %v246 = vpop.f32.mrf.mxu0
    %v247 = vadd.f32 0.0, %v246
    %v248 = vpop.f32.mrf.mxu0
    %v249 = vpop.f32.mrf.mxu0
    %v250 = vadd.f32 0.0, %v249
    %v251 = vpop.f32.mrf.mxu0
    %252 = vdwg.mxu0
    %v253 = vadd.f32 %v60, %v191
    %v254 = vadd.f32 %v61, %v194
    %v255 = vadd.f32 %v62, %v199
    %v256 = vadd.f32 %v63, %v202
    %v257 = vadd.f32 %v64, %v207
    %v258 = vadd.f32 %v65, %v210
    %v259 = vadd.f32 %v66, %v215
    %v260 = vadd.f32 %v67, %v218
    %v261 = vadd.f32 %v68, %v223
    %v262 = vadd.f32 %v69, %v226
    %v263 = vadd.f32 %v70, %v231
    %v264 = vadd.f32 %v71, %v234
    %v265 = vadd.f32 %v72, %v239
    %v266 = vadd.f32 %v73, %v242
    %v267 = vadd.f32 %v74, %v247
    %v268 = vadd.f32 %v75, %v250
    %269 = vst [vmem:[#allocation2] sm:$0xff] %v253
    %270 = vst [vmem:[#allocation2 + $0x8] sm:$0xff] %v254
    %271 = vst [vmem:[#allocation2 + $0x10] sm:$0xff] %v255
    %272 = vst [vmem:[#allocation2 + $0x18] sm:$0xff] %v256
    %273 = vst [vmem:[#allocation2 + $0x20] sm:$0xff] %v257
    %274 = vst [vmem:[#allocation2 + $0x28] sm:$0xff] %v258
    %275 = vst [vmem:[#allocation2 + $0x30] sm:$0xff] %v259
    %276 = vst [vmem:[#allocation2 + $0x38] sm:$0xff] %v260
    %277 = vst [vmem:[#allocation2 + $0x40] sm:$0xff] %v261
    %278 = vst [vmem:[#allocation2 + $0x48] sm:$0xff] %v262
    %279 = vst [vmem:[#allocation2 + $0x50] sm:$0xff] %v263
    %280 = vst [vmem:[#allocation2 + $0x58] sm:$0xff] %v264
    %281 = vst [vmem:[#allocation2 + $0x60] sm:$0xff] %v265
    %282 = vst [vmem:[#allocation2 + $0x68] sm:$0xff] %v266
    %283 = vst [vmem:[#allocation2 + $0x70] sm:$0xff] %v267
    %284 = vst [vmem:[#allocation2 + $0x78] sm:$0xff] %v268
    // Predicated region
    $region14: #{tpu_custom_call.1} parent=1 // pred_check
      %p285 = pneg %p24
    $region15: #{tpu_custom_call.1} parent=1 // pred_check_branch
      %287 = sbr.rel (%p285) target = $region17
    $region16: #{tpu_custom_call.1} parent=1 // pred_region
      %v288 = vld [vmem:[#allocation2] sm:$0xff]
      %v289 = vld [vmem:[#allocation2 + $0x8] sm:$0xff]
      %v290 = vld [vmem:[#allocation2 + $0x10] sm:$0xff]
      %v291 = vld [vmem:[#allocation2 + $0x18] sm:$0xff]
      %v292 = vld [vmem:[#allocation2 + $0x20] sm:$0xff]
      %v293 = vld [vmem:[#allocation2 + $0x28] sm:$0xff]
      %v294 = vld [vmem:[#allocation2 + $0x30] sm:$0xff]
      %v295 = vld [vmem:[#allocation2 + $0x38] sm:$0xff]
      %v296 = vld [vmem:[#allocation2 + $0x40] sm:$0xff]
      %v297 = vld [vmem:[#allocation2 + $0x48] sm:$0xff]
      %v298 = vld [vmem:[#allocation2 + $0x50] sm:$0xff]
      %v299 = vld [vmem:[#allocation2 + $0x58] sm:$0xff]
      %v300 = vld [vmem:[#allocation2 + $0x60] sm:$0xff]
      %v301 = vld [vmem:[#allocation2 + $0x68] sm:$0xff]
      %v302 = vld [vmem:[#allocation2 + $0x70] sm:$0xff]
      %v303 = vld [vmem:[#allocation2 + $0x78] sm:$0xff]
      %304 = vst [vmem:[#allocation6] sm:$0xff] %v288
      %305 = vst [vmem:[#allocation6 + $0x8] sm:$0xff] %v289
      %306 = vst [vmem:[#allocation6 + $0x10] sm:$0xff] %v290
      %307 = vst [vmem:[#allocation6 + $0x18] sm:$0xff] %v291
      %308 = vst [vmem:[#allocation6 + $0x20] sm:$0xff] %v292
      %309 = vst [vmem:[#allocation6 + $0x28] sm:$0xff] %v293
      %310 = vst [vmem:[#allocation6 + $0x30] sm:$0xff] %v294
      %311 = vst [vmem:[#allocation6 + $0x38] sm:$0xff] %v295
      %312 = vst [vmem:[#allocation6 + $0x40] sm:$0xff] %v296
      %313 = vst [vmem:[#allocation6 + $0x48] sm:$0xff] %v297
      %314 = vst [vmem:[#allocation6 + $0x50] sm:$0xff] %v298
      %315 = vst [vmem:[#allocation6 + $0x58] sm:$0xff] %v299
      %316 = vst [vmem:[#allocation6 + $0x60] sm:$0xff] %v300
      %317 = vst [vmem:[#allocation6 + $0x68] sm:$0xff] %v301
      %318 = vst [vmem:[#allocation6 + $0x70] sm:$0xff] %v302
      %319 = vst [vmem:[#allocation6 + $0x78] sm:$0xff] %v303
    $region17: #{tpu_custom_call.1} parent=1 // pred_fallthru
      _
    // Predicated region
    $region18: #{tpu_custom_call.1} parent=1 // pred_check
      _
    $region19: #{tpu_custom_call.1} parent=1 // pred_check_branch
      %321 = sbr.rel (0) target = $region21
    $region20: #{tpu_custom_call.1} parent=1 // pred_region
      %s323 = ssub.s32 2048, 2048
      %324 = vsyncadd [#allocation5], %s323
      %s325 = sshll.u32 [#allocation6], 4
      %s326 = int_to_ptr.vmem [resolvable:$true] %s325
      %331 = dma.vmem_to_hbm [thread:$0]  %s326, 2048, %s1, [#allocation5], 128, 128, 8
    $region21: #{tpu_custom_call.1} parent=1 // pred_fallthru
      _
    // Predicated region
    $region22: #{tpu_custom_call.1} parent=1 // pred_check
      _
    $region23: #{tpu_custom_call.1} parent=1 // pred_check_branch
      %333 = sbr.rel (0) target = $region25
    $region24: #{tpu_custom_call.1} parent=1 // pred_region
      %334 = dma.done [#allocation5], 2048
    $region25: #{tpu_custom_call.1} parent=1 // pred_fallthru
      _
    %335 = vsyncpa [#allocation4], 1
    %336 = vsyncpa [#allocation5], 1

</llo_original>
